<compile_context>
chip_gen: v5e
topology: v5e:2x2
jax: 0.10.0
libtpu: 0.0.40
codegen_flags: <defaults>
</compile_context>

<pallas_src>
import functools
import math

import jax
import jax.numpy as jnp
from jax.experimental import pallas as pl
from jax.experimental.pallas import tpu as pltpu


# ----------------------------------------------------------------------------- helpers
def _round_up(n, m):
    return ((n + m - 1) // m) * m


def _sublane(dtype):
    # Native sublane tile: 8 rows for 4-byte, 16 for 2-byte, 32 for 1-byte dtypes.
    return max(8, 32 // jnp.dtype(dtype).itemsize)


def _vmem_capacity_bytes():
    # Pure hardware query (never masks kernel errors); conservative fallback is
    # the smallest per-core VMEM of current chips (v7x: 64 MiB).
    try:
        return int(pltpu.get_tpu_info().vmem_capacity_bytes)
    except Exception:  # query-only fallback
        return 64 << 20


def _vmem_limit(needed, cap):
    # Only raise the scoped-VMEM limit above the compiler default when the
    # footprint needs it; never declare more than the chip has.
    if needed <= (16 << 20):
        return None
    return int(min(needed, cap))


def _pick_bm(B, sub, vmem_cap):
    # Large enough to amortize the ~0.35 us per-grid-step overhead, small enough
    # that the grid has >= 2 steps (v7x megacore) and tiles fit VMEM.
    bm_cap = 1024 if vmem_cap >= (96 << 20) else 512
    B_r = _round_up(B, sub)
    return max(sub, min(bm_cap, _round_up(pl.cdiv(B_r, 2), sub)))


# ----------------------------------------------------------------------------- kernels
def _rk1_kernel(x_ref, w_ref, b_ref, o_ref, *, h):
    # MXU: z = x @ Wt (f32 accumulate); VPU: +bias, residual; EUP: tanh.
    x = x_ref[...]
    w = w_ref[...]
    z = jnp.dot(x.astype(w.dtype), w, preferred_element_type=jnp.float32)
    z = z + b_ref[...].astype(jnp.float32)
    o_ref[...] = (x.astype(jnp.float32) + h * jnp.tanh(z)).astype(o_ref.dtype)


def _rk1_kernel_ntiled(x_ref, w_ref, b_ref, o_ref, *, h, tn):
    # Weight streamed along the output (lane) dim; the residual uses the matching
    # 128-aligned column slice of the x tile (x tile is constant across j).
    j = pl.program_id(1)
    x = x_ref[...]
    w = w_ref[...]
    z = jnp.dot(x.astype(w.dtype), w, preferred_element_type=jnp.float32)
    z = z + b_ref[...].astype(jnp.float32)
    col0 = pl.multiple_of(j * tn, 128)
    x_res = x_ref[:, pl.ds(col0, tn)]
    o_ref[...] = (x_res.astype(jnp.float32) + h * jnp.tanh(z)).astype(o_ref.dtype)


def _rk1_stack_kernel(x_ref, w_ref, b_ref, o_ref, acc_ref, *, h):
    # Fused L-layer RK1: x lives in a VMEM accumulator across the layer axis.
    l = pl.program_id(1)

    @pl.when(l == 0)
    def _():
        acc_ref[...] = x_ref[...].astype(jnp.float32)

    a = acc_ref[...]
    w = w_ref[...]
    z = jnp.dot(a.astype(w.dtype), w, preferred_element_type=jnp.float32)
    z = z + b_ref[...].astype(jnp.float32)
    acc_ref[...] = a + h * jnp.tanh(z)

    @pl.when(l == pl.num_programs(1) - 1)
    def _():
        o_ref[...] = acc_ref[...].astype(o_ref.dtype)


# ----------------------------------------------------------------------------- builders
def _build_resident_call(B_pad, D, bm, x_dtype, w_dtype, b_dtype, h, vmem_cap):
    x_b = jnp.dtype(x_dtype).itemsize
    w_b = jnp.dtype(w_dtype).itemsize
    b_b = jnp.dtype(b_dtype).itemsize
    needed = (4 * bm * D * x_b        # x + out tiles, double buffered
              + 2 * D * D * w_b       # grid-invariant weight (double buffered, DMA'd once)
              + 2 * D * b_b
              + (2 << 20))            # compiler internal-scratch slack
    cost = pl.CostEstimate(
        flops=2 * B_pad * D * D,
        transcendentals=B_pad * D,
        bytes_accessed=2 * B_pad * D * x_b + D * D * w_b + D * b_b,
    )
    return pl.pallas_call(
        functools.partial(_rk1_kernel, h=h),
        out_shape=jax.ShapeDtypeStruct((B_pad, D), x_dtype),
        grid=(B_pad // bm,),
        in_specs=[
            pl.BlockSpec((bm, D), lambda i: (i, 0)),   # x tile, streamed
            pl.BlockSpec((D, D), lambda i: (0, 0)),    # weight, grid-invariant
            pl.BlockSpec((1, D), lambda i: (0, 0)),    # bias, grid-invariant
        ],
        out_specs=pl.BlockSpec((bm, D), lambda i: (i, 0)),
        compiler_params=pltpu.CompilerParams(
            dimension_semantics=("parallel",),         # megacore split over batch tiles
            vmem_limit_bytes=_vmem_limit(needed, vmem_cap),
        ),
        cost_estimate=cost,
    )


def _build_ntiled_call(B_pad, D, bm, tn, x_dtype, w_dtype, b_dtype, h, vmem_cap):
    x_b = jnp.dtype(x_dtype).itemsize
    w_b = jnp.dtype(w_dtype).itemsize
    b_b = jnp.dtype(b_dtype).itemsize
    nb, nj = B_pad // bm, D // tn
    needed = (2 * bm * D * x_b        # x tile (constant over j), double buffered
              + 2 * bm * tn * x_b     # out tile
              + 2 * D * tn * w_b      # streamed weight tile
              + 2 * tn * b_b
              + (2 << 20))
    cost = pl.CostEstimate(
        flops=2 * B_pad * D * D,
        transcendentals=B_pad * D,
        bytes_accessed=2 * B_pad * D * x_b + nb * D * D * w_b + D * b_b,
    )
    return pl.pallas_call(
        functools.partial(_rk1_kernel_ntiled, h=h, tn=tn),
        out_shape=jax.ShapeDtypeStruct((B_pad, D), x_dtype),
        grid=(nb, nj),
        in_specs=[
            pl.BlockSpec((bm, D), lambda i, j: (i, 0)),   # constant over j -> no re-fetch
            pl.BlockSpec((D, tn), lambda i, j: (0, j)),   # weight tile streamed
            pl.BlockSpec((1, tn), lambda i, j: (0, j)),
        ],
        out_specs=pl.BlockSpec((bm, tn), lambda i, j: (i, j)),
        compiler_params=pltpu.CompilerParams(
            dimension_semantics=("parallel", "parallel"),
            vmem_limit_bytes=_vmem_limit(needed, vmem_cap),
        ),
        cost_estimate=cost,
    )


# ----------------------------------------------------------------------------- wrappers
def resnet_layer_rk1(x, weight, bias, *, h=1.0, bm=None, n_tile=None, param_dtype=None):
    """Forward of ResNetLayerRK1 with layer=Linear, activation=Tanh.

    x: (B, D); weight: (D, D) in PyTorch (out_features, in_features) layout;
    bias: (D,).  Returns x + h * tanh(x @ weight.T + bias).
    param_dtype: optional weight dtype (e.g. jnp.bfloat16) to halve the weight
    footprint and use the full-rate bf16 MXU path.
    """
    B, D_in = x.shape
    D_out, D_in_w = weight.shape
    assert D_in_w == D_in and D_out == D_in, "layer must be shape-preserving"
    D = D_out

    # One-time transpose to MXU-native (in, out) layout; guarantees the in-kernel
    # contraction needs no per-step XLU transpose of the grid-invariant weight.
    w_t = weight.T
    if param_dtype is not None:
        w_t = w_t.astype(param_dtype)
    b2 = bias.reshape(1, D)              # cast to f32 happens once in-kernel

    sub = _sublane(x.dtype)
    vmem_cap = _vmem_capacity_bytes()
    if bm is None:
        bm = _pick_bm(B, sub, vmem_cap)
    else:
        bm = max(sub, _round_up(bm, sub))
    B_pad = _round_up(B, bm)
    x_p = x if B_pad == B else jnp.pad(x, ((0, B_pad - B), (0, 0)))

    x_b = jnp.dtype(x.dtype).itemsize
    w_b = jnp.dtype(w_t.dtype).itemsize
    budget = (vmem_cap * 3) // 4         # leave headroom for compiler scratch

    tn = n_tile
    if tn is None:
        resident_needed = 4 * bm * D * x_b + 2 * D * D * w_b + (4 << 20)
        if resident_needed > budget and D % 128 == 0:
            # Generation-aware cutover: stream the weight over the output dim.
            for cand in (512, 256, 128):
                if D % cand == 0:
                    tn = cand
                    tiled_needed = (2 * bm * D * x_b + 2 * bm * cand * x_b
                                    + 2 * D * cand * w_b + (4 << 20))
                    if tiled_needed <= budget:
                        break
    else:
        assert tn % 128 == 0 and D % tn == 0, "n_tile must be a 128-multiple dividing D"

    if tn is None:
        call = _build_resident_call(B_pad, D, bm, x.dtype, w_t.dtype, b2.dtype, h, vmem_cap)
    else:
        call = _build_ntiled_call(B_pad, D, bm, tn, x.dtype, w_t.dtype, b2.dtype, h, vmem_cap)
    out = call(x_p, w_t, b2)
    return out if B_pad == B else out[:B]


def resnet_rk1_stack(x, weights, biases, *, h=1.0, bm=None, param_dtype=None):
    """Fused stack of L RK1 layers in a single pallas_call.

    weights: (L, D, D) in PyTorch (out, in) layout; biases: (L, D).
    x stays resident in a VMEM accumulator across the layer axis; per-layer
    weights are streamed (and prefetched) by the pipeline.
    """
    B, D = x.shape
    L = weights.shape[0]
    assert weights.shape == (L, D, D) and biases.shape == (L, D)

    w_t = jnp.transpose(weights, (0, 2, 1))            # (L, in, out), one-time
    if param_dtype is not None:
        w_t = w_t.astype(param_dtype)
    b3 = biases.reshape(L, 1, D)

    sub = _sublane(x.dtype)
    vmem_cap = _vmem_capacity_bytes()
    if bm is None:
        bm = _pick_bm(B, sub, vmem_cap)
    else:
        bm = max(sub, _round_up(bm, sub))
    B_pad = _round_up(B, bm)
    x_p = x if B_pad == B else jnp.pad(x, ((0, B_pad - B), (0, 0)))

    x_b = jnp.dtype(x.dtype).itemsize
    w_b = jnp.dtype(w_t.dtype).itemsize
    nb = B_pad // bm
    needed = (4 * bm * D * x_b + 2 * D * D * w_b + 2 * D * 4
              + bm * D * 4 + (2 << 20))
    cost = pl.CostEstimate(
        flops=2 * L * B_pad * D * D,
        transcendentals=L * B_pad * D,
        bytes_accessed=2 * B_pad * D * x_b + nb * L * D * D * w_b + L * D * 4,
    )
    out = pl.pallas_call(
        functools.partial(_rk1_stack_kernel, h=h),
        out_shape=jax.ShapeDtypeStruct((B_pad, D), x.dtype),
        grid=(nb, L),
        in_specs=[
            pl.BlockSpec((bm, D), lambda i, l: (i, 0)),                 # x, fetched once per i
            pl.BlockSpec((pl.Squeezed(), D, D), lambda i, l: (l, 0, 0)),  # layer-l weight
            pl.BlockSpec((pl.Squeezed(), 1, D), lambda i, l: (l, 0, 0)),  # layer-l bias
        ],
        out_specs=pl.BlockSpec((bm, D), lambda i, l: (i, 0)),
        scratch_shapes=[pltpu.VMEM((bm, D), jnp.float32)],              # carried activation
        compiler_params=pltpu.CompilerParams(
            dimension_semantics=("parallel", "arbitrary"),
            vmem_limit_bytes=_vmem_limit(needed, vmem_cap),
        ),
        cost_estimate=cost,
    )(x_p, w_t, b3)
    return out if B_pad == B else out[:B]


# ----------------------------------------------------------------------------- test
if __name__ == "__main__":
    key = jax.random.PRNGKey(0)
    kx, kw, kb, kx2, kw2, kb2, kws, kbs = jax.random.split(key, 8)
    h = 1.0

    def torch_linear_init(k_w, k_b, d, lead=()):
        # nn.Linear(d, d) default init: U(-1/sqrt(d), 1/sqrt(d))
        bound = 1.0 / math.sqrt(d)
        w = jax.random.uniform(k_w, lead + (d, d), minval=-bound, maxval=bound, dtype=jnp.float32)
        b = jax.random.uniform(k_b, lead + (d,), minval=-bound, maxval=bound, dtype=jnp.float32)
        return w, b

    # --- Case 1/2: resident-weight path, aligned (B=16) and ragged (B=20) batch.
    D = 128
    weight, bias = torch_linear_init(kw, kb, D)
    for B in (16, 20):
        x = jax.random.normal(kx, (B, D), dtype=jnp.float32)
        out = jax.block_until_ready(resnet_layer_rk1(x, weight, bias, h=h))
        ref = x + h * jnp.tanh(x @ weight.T + bias)
        assert out.shape == x.shape and out.dtype == x.dtype
        assert jnp.allclose(out, ref, atol=1e-5, rtol=1e-5)

    # --- Case 3: bf16 weight option (halved weight footprint, full-rate MXU path).
    x = jax.random.normal(kx, (16, D), dtype=jnp.float32)
    out = jax.block_until_ready(
        resnet_layer_rk1(x, weight, bias, h=h, param_dtype=jnp.bfloat16))
    ref = x + h * jnp.tanh(x @ weight.T + bias)
    assert jnp.allclose(out, ref, atol=5e-2, rtol=5e-2)

    # --- Case 4: forced N-tiled weight path (large-D / small-VMEM escape hatch).
    D2, B2 = 256, 64
    weight2, bias2 = torch_linear_init(kw2, kb2, D2)
    x2 = jax.random.normal(kx2, (B2, D2), dtype=jnp.float32)
    out2 = jax.block_until_ready(resnet_layer_rk1(x2, weight2, bias2, h=h, n_tile=128))
    ref2 = x2 + h * jnp.tanh(x2 @ weight2.T + bias2)
    assert jnp.allclose(out2, ref2, atol=1e-5, rtol=1e-5)

    # --- Case 5: fused stack of 3 RK1 layers in one pallas_call.
    L = 3
    weights, biases = torch_linear_init(kws, kbs, D, lead=(L,))
    xs = jax.random.normal(kx, (16, D), dtype=jnp.float32)
    outs = jax.block_until_ready(resnet_rk1_stack(xs, weights, biases, h=h))
    refs = xs
    for l in range(L):
        refs = refs + h * jnp.tanh(refs @ weights[l].T + biases[l])
    assert outs.shape == xs.shape and outs.dtype == xs.dtype
    assert jnp.allclose(outs, refs, atol=1e-4, rtol=1e-4)

    print("KERNEL_OK")
</pallas_src>

<mosaic_0001>
module attributes {stable_mosaic.version = 11 : i64} {
  func.func @_rk1_kernel(%arg0: i32, %arg1: memref<8x128xf32, #tpu.memory_space<vmem>>, %arg2: memref<128x128xf32, #tpu.memory_space<vmem>>, %arg3: memref<1x128xf32, #tpu.memory_space<vmem>>, %arg4: memref<8x128xf32, #tpu.memory_space<vmem>>) attributes {dimension_semantics = [#tpu.dimension_semantics<parallel>], iteration_bounds = array<i64: 2>, scalar_prefetch = 0 : i64, scratch_operands = 0 : i64, tpu.core_type = #tpu.core_type<tc>, window_params = [{transform_indices = @transform_0, window_bounds = array<i64: 8, 128>}, {pipeline_mode = #tpu.pipeline_mode<synchronous>, transform_indices = @transform_1, window_bounds = array<i64: 128, 128>}, {pipeline_mode = #tpu.pipeline_mode<synchronous>, transform_indices = @transform_2, window_bounds = array<i64: 1, 128>}, {transform_indices = @transform_3, window_bounds = array<i64: 8, 128>}]} {
    %c0 = arith.constant 0 : index
    %c0_0 = arith.constant 0 : index
    %0 = vector.load %arg1[%c0, %c0_0] : memref<8x128xf32, #tpu.memory_space<vmem>>, vector<8x128xf32>
    %c0_1 = arith.constant 0 : index
    %c0_2 = arith.constant 0 : index
    %1 = vector.load %arg2[%c0_1, %c0_2] : memref<128x128xf32, #tpu.memory_space<vmem>>, vector<128x128xf32>
    %cst = arith.constant dense<0.000000e+00> : vector<8x128xf32>
    %2 = tpu.matmul %0, %1, %cst {dimension_numbers = #tpu.dot_dimension_numbers<[1], [0], [0], [1], [0, 0, 1, 1], [], []>} : vector<8x128xf32>, vector<128x128xf32>, vector<8x128xf32> -> vector<8x128xf32>
    %c0_3 = arith.constant 0 : index
    %c0_4 = arith.constant 0 : index
    %3 = vector.load %arg3[%c0_3, %c0_4] : memref<1x128xf32, #tpu.memory_space<vmem>>, vector<1x128xf32>
    %4 = vector.broadcast %3 : vector<1x128xf32> to vector<8x128xf32>
    %5 = arith.addf %2, %4 : vector<8x128xf32>
    %6 = math.tanh %5 : vector<8x128xf32>
    %cst_5 = arith.constant 1.000000e+00 : f32
    %7 = vector.broadcast %cst_5 : f32 to vector<8x128xf32>
    %8 = arith.mulf %7, %6 : vector<8x128xf32>
    %9 = arith.addf %0, %8 : vector<8x128xf32>
    %c0_6 = arith.constant 0 : index
    %c0_7 = arith.constant 0 : index
    %10 = vector.load %arg4[%c0_6, %c0_7] : memref<8x128xf32, #tpu.memory_space<vmem>>, vector<8x128xf32>
    tpu.vector_store %arg4[%c0_6, %c0_7], %9 {strides = array<i32>} : memref<8x128xf32, #tpu.memory_space<vmem>>, vector<8x128xf32>,
    return
  }
  func.func @transform_0(%arg0: i32) -> (i32, i32) {
    %c0_i32 = arith.constant 0 : i32
    %c0_i32_0 = arith.constant 0 : i32
    return %arg0, %c0_i32 : i32, i32
  }
  func.func @transform_1(%arg0: i32) -> (i32, i32) {
    %c0_i32 = arith.constant 0 : i32
    %c0_i32_0 = arith.constant 0 : i32
    %c0_i32_1 = arith.constant 0 : i32
    return %c0_i32, %c0_i32_0 : i32, i32
  }
  func.func @transform_2(%arg0: i32) -> (i32, i32) {
    %c0_i32 = arith.constant 0 : i32
    %c0_i32_0 = arith.constant 0 : i32
    %c0_i32_1 = arith.constant 0 : i32
    return %c0_i32, %c0_i32_0 : i32, i32
  }
  func.func @transform_3(%arg0: i32) -> (i32, i32) {
    %c0_i32 = arith.constant 0 : i32
    %c0_i32_0 = arith.constant 0 : i32
    return %arg0, %c0_i32 : i32, i32
  }
}

</mosaic_0001>

<llo_original>
// kernel: tpu_custom_call.1
$region0: #{tpu_custom_call.1}
  #allocation0 [shape = 'u32[]', space=smem, size = 0x4, offset = 0x4, fixed_abs, tag = 'smem constant byte address 0x4 - core index']
  #allocation1 [shape = 'u32[72,128]{1,0:T(1,128)}', space=vmem, size = 0x9000, scoped, tag = 'internal scratch']
  %s0 = inlined_call_operand.hbm [shape: f32[16,128], index: 0, kind: input, shape index: {}]
  %s1 = inlined_call_operand.hbm [shape: f32[128,128], index: 1, kind: input, shape index: {}]
  %s2 = inlined_call_operand.vmem [shape: f32[1,128], index: 2, kind: input, shape index: {}]
  %s3 = inlined_call_operand.hbm [shape: f32[16,128], index: 3, kind: output, shape index: {}]
  %s4 = sld [smem:[#allocation0]]
  $region53: #{tpu_custom_call.1} parent=0
    _
  %s6 = ssub.s32 1, %s4
  %s7 = scalar_select 0, %s6, %s4
  $region1: #{tpu_custom_call.1} parent=0
    #allocation2 [shape = 'u8[8192]{0}', space=vmem, size = 0x2000, scoped, tag = 'input window, operand 0']
    #allocation3 [shape = 's32[2]{0}', space=sflag, size = 0x8, scoped, tag = 'scoped memory for tpu_custom_call.1']
    #allocation4 [shape = 's32[2]{0}', space=sflag, size = 0x8, scoped, tag = 'scoped memory for tpu_custom_call.1']
    #allocation5 [shape = 'u8[65536]{0}', space=vmem, size = 0x10000, scoped, tag = 'input window, operand 1, single buffered']
    #allocation6 [shape = 's32[1]{0}', space=sflag, size = 0x4, scoped, tag = 'scoped memory for tpu_custom_call.1']
    #allocation7 [shape = 'u8[8192]{0}', space=vmem, size = 0x2000, scoped, tag = 'output window, operand 0']
    %8 = vsyncpa [#allocation3], 0
    %s9 = scalar_lea.sflag [#allocation3], 1
    %10 = vsyncpa %s9, 0
    %11 = vsyncpa [#allocation6], 0
    %12 = vsyncpa [#allocation4], 0
    %s13 = scalar_lea.sflag [#allocation4], 1
    %14 = vsyncpa %s13, 0
    loop: start=0, step=1, limit=4
    $region2: #{tpu_custom_call.1} parent=1 // loop_pre_header
      _
    $region3: #{tpu_custom_call.1} parent=1 // loop_header
      %s16 = sphi 0, %s20
      %p17 = scmp.ge.s32.totalorder %s16, 4
      %s26 = sphi 0, %s28
      %s29 = sphi 0, %s26
      %s30 = sphi 0, %s29
      %s46 = sphi 0, %s30
      %s50 = sphi 0, %s50
      %s52 = sphi 0, %s50
      %s53 = sphi 0, %s52
      %s67 = sphi 0, %s53
      %s71 = sphi 0, %s71
      %s73 = sphi 0, %s71
      %s74 = sphi 0, %s73
      %s88 = sphi 0, %s74
      %s94 = sphi 0, %s96
      %s97 = sphi 0, %s94
      %s98 = sphi 0, %s97
      %s114 = sphi 0, %s98
    $region4: #{tpu_custom_call.1} parent=1 // loop_header_branch
      %19 = sbr.rel (%p17) target = $region8
    $region5: #{tpu_custom_call.1} parent=1 // loop_body
      %s21 = ssub.s32 %s16, 1
      %s22 = ssub.s32 %s16, 2
      %s23 = sadd.s32 %s16, 1
      %s24 = ssub.s32 %s16, %s23
      %p25 = scmp.eq.s32.totalorder %s24, 0
      %s27 = sadd.s32 %s26, 1
      %s28 = scalar_select %p25, %s26, %s27
      %p31 = pneg %p25
      %p32 = scmp.eq.s32.totalorder %s16, 1
      %p33 = por %p31, %p32
      %p34 = scmp.ne.s32.totalorder %s26, %s29
      %p35 = scmp.eq.s32.totalorder %s16, 0
      %p36 = por %p34, %p35
      %p37 = scmp.ne.s32.totalorder %s26, %s29
      %p38 = scmp.eq.s32.totalorder %s21, 1
      %p39 = por %p37, %p38
      %p40 = scmp.ne.s32.totalorder %s29, %s30
      %p41 = scmp.eq.s32.totalorder %s21, 0
      %p42 = por %p40, %p41
      %p43 = scmp.ne.s32.totalorder %s29, %s30
      %p44 = scmp.eq.s32.totalorder %s22, 1
      %p45 = por %p43, %p44
      %p47 = scmp.ne.s32.totalorder %s30, %s46
      %p48 = scmp.eq.s32.totalorder %s22, 0
      %p49 = por %p47, %p48
      %s51 = sadd.s32 %s50, 1
      %p54 = scmp.eq.s32.totalorder %s16, 1
      %p55 = scmp.ne.s32.totalorder %s50, %s52
      %p56 = scmp.eq.s32.totalorder %s16, 0
      %p57 = por %p55, %p56
      %p58 = scmp.ne.s32.totalorder %s50, %s52
      %p59 = scmp.eq.s32.totalorder %s21, 1
      %p60 = por %p58, %p59
      %p61 = scmp.ne.s32.totalorder %s52, %s53
      %p62 = scmp.eq.s32.totalorder %s21, 0
      %p63 = por %p61, %p62
      %p64 = scmp.ne.s32.totalorder %s52, %s53
      %p65 = scmp.eq.s32.totalorder %s22, 1
      %p66 = por %p64, %p65
      %p68 = scmp.ne.s32.totalorder %s53, %s67
      %p69 = scmp.eq.s32.totalorder %s22, 0
      %p70 = por %p68, %p69
      %s72 = sadd.s32 %s71, 1
      %p75 = scmp.eq.s32.totalorder %s16, 1
      %p76 = scmp.ne.s32.totalorder %s71, %s73
      %p77 = scmp.eq.s32.totalorder %s16, 0
      %p78 = por %p76, %p77
      %p79 = scmp.ne.s32.totalorder %s71, %s73
      %p80 = scmp.eq.s32.totalorder %s21, 1
      %p81 = por %p79, %p80
      %p82 = scmp.ne.s32.totalorder %s73, %s74
      %p83 = scmp.eq.s32.totalorder %s21, 0
      %p84 = por %p82, %p83
      %p85 = scmp.ne.s32.totalorder %s73, %s74
      %p86 = scmp.eq.s32.totalorder %s22, 1
      %p87 = por %p85, %p86
      %p89 = scmp.ne.s32.totalorder %s74, %s88
      %p90 = scmp.eq.s32.totalorder %s22, 0
      %p91 = por %p89, %p90
      %s92 = ssub.s32 %s16, %s23
      %p93 = scmp.eq.s32.totalorder %s92, 0
      %s95 = sadd.s32 %s94, 1
      %s96 = scalar_select %p93, %s94, %s95
      %p99 = pneg %p93
      %p100 = scmp.eq.s32.totalorder %s16, 1
      %p101 = por %p99, %p100
      %p102 = scmp.ne.s32.totalorder %s94, %s97
      %p103 = scmp.eq.s32.totalorder %s16, 0
      %p104 = por %p102, %p103
      %p105 = scmp.ne.s32.totalorder %s94, %s97
      %p106 = scmp.eq.s32.totalorder %s21, 1
      %p107 = por %p105, %p106
      %p108 = scmp.ne.s32.totalorder %s97, %s98
      %p109 = scmp.eq.s32.totalorder %s21, 0
      %p110 = por %p108, %p109
      %p111 = scmp.ne.s32.totalorder %s97, %s98
      %p112 = scmp.eq.s32.totalorder %s22, 1
      %p113 = por %p111, %p112
      %p115 = scmp.ne.s32.totalorder %s98, %s114
      %p116 = scmp.eq.s32.totalorder %s22, 0
      %p117 = por %p115, %p116
      %p118 = scmp.le.s32.totalorder 1, %s16
      %p119 = scmp.lt.s32.totalorder %s16, 3
      %p120 = pnand %p118, %p119
      %p121 = pneg %p120
      // Predicated region
      $region9: #{tpu_custom_call.1} parent=5 // pred_check
        _
      $region10: #{tpu_custom_call.1} parent=5 // pred_check_branch
        %123 = sbr.rel (%p120) target = $region12
      $region11: #{tpu_custom_call.1} parent=5 // pred_region
        %s124 = ssub.s32 %s16, 1
        // Predicated region
        $region13: #{tpu_custom_call.1} parent=11 // pred_check
          %p125 = pneg %p63
        $region14: #{tpu_custom_call.1} parent=11 // pred_check_branch
          %127 = sbr.rel (%p125) target = $region16
        $region15: #{tpu_custom_call.1} parent=11 // pred_region
          %129 = vsyncadd [#allocation6], 0
          %s130 = sshll.u32 %s1, 4
          %s131 = int_to_ptr.hbm [resolvable:$true] %s130
          %s132 = sshll.u32 [#allocation5], 4
          %s133 = int_to_ptr.vmem [resolvable:$true] %s132
          %138 = dma.hbm_to_vmem [thread:$0]  %s131, 2048, %s133, [#allocation6], 128, 128, 8
        $region16: #{tpu_custom_call.1} parent=11 // pred_fallthru
          _
        // Predicated region
        $region17: #{tpu_custom_call.1} parent=11 // pred_check
          %p139 = pneg %p84
        $region18: #{tpu_custom_call.1} parent=11 // pred_check_branch
          %141 = sbr.rel (%p139) target = $region20
        $region19: #{tpu_custom_call.1} parent=11 // pred_region
          _
        $region20: #{tpu_custom_call.1} parent=11 // pred_fallthru
          _
      $region12: #{tpu_custom_call.1} parent=5 // pred_fallthru
        _
      %p142 = scmp.lt.s32.totalorder %s16, 2
      // Predicated region
      $region21: #{tpu_custom_call.1} parent=5 // pred_check
        %p143 = pneg %p142
      $region22: #{tpu_custom_call.1} parent=5 // pred_check_branch
        %145 = sbr.rel (%p143) target = $region24
      $region23: #{tpu_custom_call.1} parent=5 // pred_region
        // Predicated region
        $region25: #{tpu_custom_call.1} parent=23 // pred_check
          %p146 = pneg %p36
        $region26: #{tpu_custom_call.1} parent=23 // pred_check_branch
          %148 = sbr.rel (%p146) target = $region28
        $region27: #{tpu_custom_call.1} parent=23 // pred_region
          %s149 = sand.u32 %s26, 1
          %s150 = scalar_lea.sflag [#allocation3], %s149
          %s151 = sand.u32 %s26, 1
          %s152 = smul.addr %s151, 8
          %s153 = scalar_lea.vmem [#allocation2], %s152
          %155 = vsyncadd %s150, 0
          %s156 = smul.addr %s16, 8
          %s157 = scalar_lea.hbm %s0, %s156
          %s159 = sshll.u32 %s157, 4
          %s160 = int_to_ptr.hbm [resolvable:$true] %s159
          %s161 = sshll.u32 %s153, 4
          %s162 = int_to_ptr.vmem [resolvable:$true] %s161
          %164 = dma.hbm_to_vmem [thread:$0]  %s160, 128, %s162, %s150
        $region28: #{tpu_custom_call.1} parent=23 // pred_fallthru
          _
      $region24: #{tpu_custom_call.1} parent=5 // pred_fallthru
        _
      %p165 = scmp.le.s32.totalorder 1, %s16
      %p166 = scmp.lt.s32.totalorder %s16, 3
      %p167 = pnand %p165, %p166
      %p168 = pneg %p167
      // Predicated region
      $region29: #{tpu_custom_call.1} parent=5 // pred_check
        _
      $region30: #{tpu_custom_call.1} parent=5 // pred_check_branch
        %170 = sbr.rel (%p167) target = $region32
      $region31: #{tpu_custom_call.1} parent=5 // pred_region
        %s171 = ssub.s32 %s16, 1
        %s172 = sand.u32 %s29, 1
        %s173 = scalar_lea.sflag [#allocation3], %s172
        %s174 = sand.u32 %s29, 1
        %s175 = smul.addr %s174, 8
        %s176 = scalar_lea.vmem [#allocation2], %s175
        // Predicated region
        $region33: #{tpu_custom_call.1} parent=31 // pred_check
          %p177 = pneg %p42
        $region34: #{tpu_custom_call.1} parent=31 // pred_check_branch
          %179 = sbr.rel (%p177) target = $region36
        $region35: #{tpu_custom_call.1} parent=31 // pred_region
          %181 = dma.done %s173, 128
        $region36: #{tpu_custom_call.1} parent=31 // pred_fallthru
          _
        // Predicated region
        $region37: #{tpu_custom_call.1} parent=31 // pred_check
          %p182 = pneg %p63
        $region38: #{tpu_custom_call.1} parent=31 // pred_check_branch
          %184 = sbr.rel (%p182) target = $region40
        $region39: #{tpu_custom_call.1} parent=31 // pred_region
          %186 = dma.done [#allocation6], 2048
        $region40: #{tpu_custom_call.1} parent=31 // pred_fallthru
          _
        %s187 = sand.u32 %s29, 1
        %s188 = scalar_lea.sflag [#allocation3], %s187
        %s189 = sand.u32 %s29, 1
        %s190 = smul.addr %s189, 8
        %s191 = scalar_lea.vmem [#allocation2], %s190
        %p192 = pneg %p42
        %p193 = pneg %p39
        %p194 = pneg %p63
        %p195 = pneg %p60
        %p196 = pneg %p84
        %p197 = pneg %p81
        %p198 = pneg %p110
        %p199 = pneg %p107
        %s200 = sand.u32 %s97, 1
        %s201 = scalar_lea.sflag [#allocation4], %s200
        %s202 = sand.u32 %s97, 1
        %s203 = smul.addr %s202, 8
        %s204 = scalar_lea.vmem [#allocation7], %s203
        %v205 = vld [vmem:[%s176] sm:$0xff]
        %v206 = vld [vmem:[#allocation5] sm:$0xff]
        %v207 = vld [vmem:[#allocation5 + $0x8] sm:$0xff]
        %v208 = vld [vmem:[#allocation5 + $0x10] sm:$0xff]
        %v209 = vld [vmem:[#allocation5 + $0x18] sm:$0xff]
        %v210 = vld [vmem:[#allocation5 + $0x20] sm:$0xff]
        %v211 = vld [vmem:[#allocation5 + $0x28] sm:$0xff]
        %v212 = vld [vmem:[#allocation5 + $0x30] sm:$0xff]
        %v213 = vld [vmem:[#allocation5 + $0x38] sm:$0xff]
        %v214 = vld [vmem:[#allocation5 + $0x40] sm:$0xff]
        %v215 = vld [vmem:[#allocation5 + $0x48] sm:$0xff]
        %v216 = vld [vmem:[#allocation5 + $0x50] sm:$0xff]
        %v217 = vld [vmem:[#allocation5 + $0x58] sm:$0xff]
        %v218 = vld [vmem:[#allocation5 + $0x60] sm:$0xff]
        %v219 = vld [vmem:[#allocation5 + $0x68] sm:$0xff]
        %v220 = vld [vmem:[#allocation5 + $0x70] sm:$0xff]
        %v221 = vld [vmem:[#allocation5 + $0x78] sm:$0xff]
        %v222 = vld [vmem:[%s2] sm:$0x1]
        %v224 = vperm.slane %v222, 0
        %226 = vmatpush.msra.mxu0 %v221
        %227 = vmatpush.msra.mxu0 %v220
        %228 = vmatpush.msra.mxu0 %v219
        %229 = vmatpush.msra.mxu0 %v218
        %230 = vmatpush.msra.mxu0 %v217
        %231 = vmatpush.msra.mxu0 %v216
        %232 = vmatpush.msra.mxu0 %v215
        %233 = vmatpush.msra.mxu0 %v214
        %234 = vmatpush.msra.mxu0 %v213
        %235 = vmatpush.msra.mxu0 %v212
        %236 = vmatpush.msra.mxu0 %v211
        %237 = vmatpush.msra.mxu0 %v210
        %238 = vmatpush.msra.mxu0 %v209
        %239 = vmatpush.msra.mxu0 %v208
        %240 = vmatpush.msra.mxu0 %v207
        %241 = vmatpush.msra.mxu0 %v206
        %242 = vmatmul.f32.gmra.mxu0 %v205
        %v243 = vpop.f32.mrf.mxu0
        %v244 = vadd.f32 %v224, %v243
        %245 = vdwg.mxu0
        %v246 = vtanh.pop %v244
        %v247 = vadd.f32 %v205, %v246
        %248 = vst [vmem:[%s204] sm:$0xff] %v247
        %s249 = sand.u32 %s97, 1
        %s250 = scalar_lea.sflag [#allocation4], %s249
        %s251 = sand.u32 %s97, 1
        %s252 = smul.addr %s251, 8
        %s253 = scalar_lea.vmem [#allocation7], %s252
        // Predicated region
        $region41: #{tpu_custom_call.1} parent=31 // pred_check
          %p254 = pneg %p107
        $region42: #{tpu_custom_call.1} parent=31 // pred_check_branch
          %256 = sbr.rel (%p254) target = $region44
        $region43: #{tpu_custom_call.1} parent=31 // pred_region
          %258 = vsyncadd %s250, 0
          %s259 = smul.addr %s21, 8
          %s260 = scalar_lea.hbm %s3, %s259
          %s262 = sshll.u32 %s253, 4
          %s263 = int_to_ptr.vmem [resolvable:$true] %s262
          %s264 = sshll.u32 %s260, 4
          %s265 = int_to_ptr.hbm [resolvable:$true] %s264
          %267 = dma.vmem_to_hbm [thread:$0]  %s263, 128, %s265, %s250
        $region44: #{tpu_custom_call.1} parent=31 // pred_fallthru
          _
      $region32: #{tpu_custom_call.1} parent=5 // pred_fallthru
        _
      %p268 = scmp.le.s32.totalorder 2, %s16
      // Predicated region
      $region45: #{tpu_custom_call.1} parent=5 // pred_check
        %p269 = pneg %p268
      $region46: #{tpu_custom_call.1} parent=5 // pred_check_branch
        %271 = sbr.rel (%p269) target = $region48
      $region47: #{tpu_custom_call.1} parent=5 // pred_region
        %s272 = ssub.s32 %s16, 2
        // Predicated region
        $region49: #{tpu_custom_call.1} parent=47 // pred_check
          %p273 = pneg %p113
        $region50: #{tpu_custom_call.1} parent=47 // pred_check_branch
          %275 = sbr.rel (%p273) target = $region52
        $region51: #{tpu_custom_call.1} parent=47 // pred_region
          %s276 = sand.u32 %s98, 1
          %s277 = scalar_lea.sflag [#allocation4], %s276
          %s278 = sand.u32 %s98, 1
          %s279 = smul.addr %s278, 8
          %s280 = scalar_lea.vmem [#allocation7], %s279
          %282 = dma.done %s277, 128
        $region52: #{tpu_custom_call.1} parent=47 // pred_fallthru
          _
      $region48: #{tpu_custom_call.1} parent=5 // pred_fallthru
        _
    $region6: #{tpu_custom_call.1} parent=1 // loop_footer
      %s20 = sadd.s32 1, %s16
    $region7: #{tpu_custom_call.1} parent=1 // loop_footer_branch
      %15 = sbr.rel target = $region3
    $region8: #{tpu_custom_call.1} parent=1 // loop_exit
      _
    %283 = vsyncpa [#allocation3], 1
    %s284 = scalar_lea.sflag [#allocation3], 1
    %285 = vsyncpa %s284, 1
    %286 = vsyncpa [#allocation6], 1
    %287 = vsyncpa [#allocation4], 1
    %s288 = scalar_lea.sflag [#allocation4], 1
    %289 = vsyncpa %s288, 1

</llo_original>
